<compile_context>
chip_gen: v7x
topology: tpu7x:2x2x1
jax: 0.10.0
libtpu: 0.0.40
codegen_flags: <defaults>
</compile_context>

<pallas_src>
import functools

import jax
import jax.numpy as jnp
from jax import lax
from jax.experimental import pallas as pl
from jax.experimental.pallas import tpu as pltpu

_EPS = 1e-8            # F.cosine_similarity default eps
_SUBLANE = 8
_DEFAULT_TB_CAP = 512
_FAST_PATH_KV_BYTES = 64 * 1024


# --------------------------------------------------------------------------
# Kernel
# --------------------------------------------------------------------------
def _attn_kernel(m_slots, has_emotion, *refs):
    """One grid step == TB batch rows.

    q_ref  : (TB, D)      queries
    k_ref  : (TB*M, D)    memory keys   (batch*slot flattened)
    v_ref  : (TB*M, D)    memory values (batch*slot flattened)
    e_ref  : (TB, M)      emotion weights (only when has_emotion)
    w*_ref : (D, D)       torch Linear weights, stored (out, in)
    b*_ref : (1, D)       biases
    out_ref: (TB, D)      context readout
    """
    if has_emotion:
        (q_ref, k_ref, v_ref, e_ref,
         wq_ref, bq_ref, wk_ref, bk_ref, wv_ref, bv_ref, out_ref) = refs
    else:
        (q_ref, k_ref, v_ref,
         wq_ref, bq_ref, wk_ref, bk_ref, wv_ref, bv_ref, out_ref) = refs
        e_ref = None

    tb, d = q_ref.shape

    # torch Linear y = x @ W^T + b with W stored (out, in): contract W's "in"
    # axis directly (rhs-transposed MXU matmul, f32 accumulation).
    dn = (((1,), (1,)), ((), ()))
    qp = lax.dot_general(q_ref[...], wq_ref[...], dn,
                         preferred_element_type=jnp.float32) + bq_ref[...]
    kp = lax.dot_general(k_ref[...], wk_ref[...], dn,
                         preferred_element_type=jnp.float32) + bk_ref[...]
    vp = lax.dot_general(v_ref[...], wv_ref[...], dn,
                         preferred_element_type=jnp.float32) + bv_ref[...]

    # (TB*M, D) -> (TB, M, D).  For M % 8 == 0 this lands exactly on sublane
    # tiles, so it is a layout no-op (no relayout copy).
    kp3 = kp.reshape(tb, m_slots, d)
    vp3 = vp.reshape(tb, m_slots, d)

    # Cosine similarity, exact PyTorch semantics: clamp the *product* of the
    # squared norms by eps^2, then a single rsqrt (EUP slot).
    q_sq = jnp.sum(qp * qp, axis=-1, keepdims=True)          # (TB, 1)
    k_sq = jnp.sum(kp3 * kp3, axis=-1)                       # (TB, M)
    dots = jnp.sum(kp3 * qp[:, None, :], axis=-1)            # (TB, M)
    sim = dots * lax.rsqrt(jnp.maximum(q_sq * k_sq, _EPS * _EPS))

    if has_emotion:
        sim = sim * e_ref[...].astype(jnp.float32)

    # Softmax over the memory-slot axis.
    mmax = jnp.max(sim, axis=-1, keepdims=True)               # (TB, 1)
    ex = jnp.exp(sim - mmax)                                  # (TB, M)
    denom = jnp.sum(ex, axis=-1, keepdims=True)               # (TB, 1)
    r = pl.reciprocal(denom, approx=True)                     # EUP slot
    r = r * (2.0 - denom * r)                                 # one Newton step -> ~f32 exact
    attn = ex * r                                             # (TB, M)

    # Weighted readout: VPU mul + sublane reduce (trivial next to K/V DMA at
    # small M).  TODO(synk): large M -> MXU readout + online softmax over M.
    ctx = jnp.sum(attn[:, :, None] * vp3, axis=1)             # (TB, D)
    out_ref[...] = ctx.astype(out_ref.dtype)


# --------------------------------------------------------------------------
# Tiling / VMEM budgeting
# --------------------------------------------------------------------------
def _round_up(x, m):
    return -(-x // m) * m


def _vmem_capacity_bytes():
    try:
        return int(pltpu.get_tpu_info().vmem_capacity_bytes)
    except Exception:
        return 64 * 1024 * 1024     # conservative (v7x per-TC) fallback


def _vmem_estimate_bytes(tb, m, d, in_item, out_item, has_emotion):
    """Per-step VMEM: double-buffered data tiles, single-buffered weights,
    plus the f32 in-kernel intermediates (qp/kp/vp + 3-D views + ctx)."""
    kv_tiles = 2 * 2 * tb * m * d * in_item          # K, V (double-buffered)
    q_tile = 2 * tb * d * in_item
    e_tile = (2 * tb * m * 4) if has_emotion else 0
    o_tile = 2 * tb * d * out_item
    weights = 3 * d * d * 4 + 3 * d * 4              # pl.Buffered(1)
    interm = (5 * tb * m * d + 4 * tb * d) * 4
    return kv_tiles + q_tile + e_tile + o_tile + weights + interm


def _pick_tb(b, m, d, in_item, out_item, has_emotion, tb_cap, vmem_budget):
    tb = max(_SUBLANE, min(_round_up(b, _SUBLANE), _round_up(tb_cap, _SUBLANE)))
    while tb > _SUBLANE and _vmem_estimate_bytes(
            tb, m, d, in_item, out_item, has_emotion) > vmem_budget:
        tb -= _SUBLANE
    # v7x megacore: once there is enough work, keep >= 2 grid steps so the
    # "parallel" batch axis can be sharded across both TensorCores.
    if b >= 16 and tb >= _round_up(b, _SUBLANE):
        tb = max(_SUBLANE, _round_up(-(-b // 2), _SUBLANE))
    return tb


# --------------------------------------------------------------------------
# Pallas wrapper
# --------------------------------------------------------------------------
def _pallas_forward(query, memory_keys, memory_values, params,
                    emotion_weights, tb_cap):
    B, D = query.shape
    M = memory_keys.shape[1]
    out_dtype = query.dtype
    has_emotion = emotion_weights is not None

    in_item = jnp.dtype(memory_keys.dtype).itemsize
    out_item = jnp.dtype(out_dtype).itemsize

    vmem_cap = _vmem_capacity_bytes()
    TB = _pick_tb(B, M, D, in_item, out_item, has_emotion,
                  tb_cap, vmem_budget=(vmem_cap * 3) // 5)
    n_blocks = pl.cdiv(B, TB)
    Bp = n_blocks * TB

    if Bp != B:
        pad = Bp - B
        query = jnp.pad(query, ((0, pad), (0, 0)))
        memory_keys = jnp.pad(memory_keys, ((0, pad), (0, 0), (0, 0)))
        memory_values = jnp.pad(memory_values, ((0, pad), (0, 0), (0, 0)))
        if has_emotion:
            emotion_weights = jnp.pad(emotion_weights, ((0, pad), (0, 0)))

    # Flatten batch*slot so each projection matmul has TB*M LHS rows.
    keys2d = memory_keys.reshape(Bp * M, D)
    vals2d = memory_values.reshape(Bp * M, D)

    bq = params["bq"].reshape(1, D)
    bk = params["bk"].reshape(1, D)
    bv = params["bv"].reshape(1, D)

    const2 = lambda b: (0, 0)
    single = pl.Buffered(1)        # constant blocks: no double-buffer VMEM

    in_specs = [
        pl.BlockSpec((TB, D), lambda b: (b, 0)),          # query
        pl.BlockSpec((TB * M, D), lambda b: (b, 0)),      # keys (flattened)
        pl.BlockSpec((TB * M, D), lambda b: (b, 0)),      # values (flattened)
    ]
    inputs = [query, keys2d, vals2d]
    if has_emotion:
        in_specs.append(pl.BlockSpec((TB, M), lambda b: (b, 0)))
        inputs.append(emotion_weights)
    in_specs += [
        pl.BlockSpec((D, D), const2, pipeline_mode=single),   # Wq (out, in)
        pl.BlockSpec((1, D), const2, pipeline_mode=single),   # bq
        pl.BlockSpec((D, D), const2, pipeline_mode=single),   # Wk
        pl.BlockSpec((1, D), const2, pipeline_mode=single),   # bk
        pl.BlockSpec((D, D), const2, pipeline_mode=single),   # Wv
        pl.BlockSpec((1, D), const2, pipeline_mode=single),   # bv
    ]
    inputs += [params["wq"], bq, params["wk"], bk, params["wv"], bv]

    flops = int(2 * D * D * Bp * (1 + 2 * M)       # projections
                + 6 * Bp * M * D                   # dots / norms / readout
                + 12 * Bp * M)                     # softmax & scaling
    transcendentals = int(Bp * (2 * M + 2))        # exp, rsqrt, reciprocal
    bytes_accessed = int(in_item * (Bp * D + 2 * Bp * M * D)
                         + (Bp * M * 4 if has_emotion else 0)
                         + 4 * (3 * D * D + 3 * D)
                         + out_item * Bp * D)

    out = pl.pallas_call(
        functools.partial(_attn_kernel, M, has_emotion),
        out_shape=jax.ShapeDtypeStruct((Bp, D), out_dtype),
        grid=(n_blocks,),
        in_specs=in_specs,
        out_specs=pl.BlockSpec((TB, D), lambda b: (b, 0)),
        compiler_params=pltpu.CompilerParams(
            dimension_semantics=("parallel",),
            vmem_limit_bytes=int((vmem_cap * 3) // 4)),
        cost_estimate=pl.CostEstimate(flops=flops,
                                      transcendentals=transcendentals,
                                      bytes_accessed=bytes_accessed),
    )(*inputs)

    return out[:B] if Bp != B else out


def _reference(query, memory_keys, memory_values, params, emotion_weights=None):
    """Pure-JAX forward mirroring the PyTorch module (tiny-problem fast path
    and test oracle).  Uses the same eps semantics as F.cosine_similarity."""
    qp = query @ params["wq"].T + params["bq"]                 # (B, D)
    kp = memory_keys @ params["wk"].T + params["bk"]           # (B, M, D)
    vp = memory_values @ params["wv"].T + params["bv"]         # (B, M, D)
    q = qp[:, None, :]
    num = jnp.sum(q * kp, axis=-1)                             # (B, M)
    den = jnp.sqrt(jnp.maximum(jnp.sum(q * q, axis=-1) *
                               jnp.sum(kp * kp, axis=-1), _EPS * _EPS))
    sim = num / den
    if emotion_weights is not None:
        sim = sim * emotion_weights
    attn = jax.nn.softmax(sim, axis=-1)[..., None]             # (B, M, 1)
    return jnp.sum(attn * vp, axis=1)                          # (B, D)


@functools.partial(jax.jit, static_argnames=("tb_cap", "force_pallas"))
def concept_similarity_memory_attention(query, memory_keys, memory_values,
                                        params, emotion_weights=None, *,
                                        tb_cap=_DEFAULT_TB_CAP,
                                        force_pallas=False):
    """JAX/Pallas equivalent of ConceptSimilarityMemoryAttention.forward."""
    kv_bytes = 2 * memory_keys.size * jnp.dtype(memory_keys.dtype).itemsize
    if not force_pallas and kv_bytes < _FAST_PATH_KV_BYTES:
        # Tiny problem: kernel-launch / DMA-setup cost dwarfs the math.
        return _reference(query, memory_keys, memory_values, params,
                          emotion_weights)
    return _pallas_forward(query, memory_keys, memory_values, params,
                           emotion_weights, tb_cap)


# --------------------------------------------------------------------------
# Tests
# --------------------------------------------------------------------------
def _make_inputs(key, B, M, D):
    ks = jax.random.split(key, 10)
    scale = 1.0 / jnp.sqrt(jnp.float32(D))
    params = {
        "wq": jax.random.normal(ks[0], (D, D), jnp.float32) * scale,
        "bq": jax.random.normal(ks[1], (D,), jnp.float32) * scale,
        "wk": jax.random.normal(ks[2], (D, D), jnp.float32) * scale,
        "bk": jax.random.normal(ks[3], (D,), jnp.float32) * scale,
        "wv": jax.random.normal(ks[4], (D, D), jnp.float32) * scale,
        "bv": jax.random.normal(ks[5], (D,), jnp.float32) * scale,
    }
    query = jax.random.normal(ks[6], (B, D), jnp.float32)
    memory_keys = jax.random.normal(ks[7], (B, M, D), jnp.float32)
    memory_values = jax.random.normal(ks[8], (B, M, D), jnp.float32)
    emotion_weights = jax.random.uniform(ks[9], (B, M), jnp.float32)
    return params, query, memory_keys, memory_values, emotion_weights


if __name__ == "__main__":
    key = jax.random.PRNGKey(0)
    k_small, k_big = jax.random.split(key)

    # Module-sized shapes: B=2, M=8 memory slots, hidden D=32.
    B, M, D = 2, 8, 32
    params, q, mk, mv, ew = _make_inputs(k_small, B, M, D)

    out = jax.block_until_ready(
        concept_similarity_memory_attention(q, mk, mv, params, ew,
                                            force_pallas=True))
    ref = _reference(q, mk, mv, params, ew)
    assert out.shape == (B, D)
    assert jnp.allclose(out, ref, atol=1e-4, rtol=1e-4), (
        f"max abs err {float(jnp.max(jnp.abs(out - ref)))}")

    # emotion_weights=None path (specialized kernel variant, no dummy array).
    out2 = jax.block_until_ready(
        concept_similarity_memory_attention(q, mk, mv, params, None,
                                            force_pallas=True))
    ref2 = _reference(q, mk, mv, params, None)
    assert jnp.allclose(out2, ref2, atol=1e-4, rtol=1e-4), (
        f"max abs err {float(jnp.max(jnp.abs(out2 - ref2)))}")

    # Larger batch: exercises a multi-step grid (>=2 steps for v7x megacore),
    # batch padding, and larger tiles.
    B2 = 20
    params2, q2, mk2, mv2, ew2 = _make_inputs(k_big, B2, M, D)
    out3 = jax.block_until_ready(
        concept_similarity_memory_attention(q2, mk2, mv2, params2, ew2,
                                            force_pallas=True))
    ref3 = _reference(q2, mk2, mv2, params2, ew2)
    assert out3.shape == (B2, D)
    assert jnp.allclose(out3, ref3, atol=1e-4, rtol=1e-4), (
        f"max abs err {float(jnp.max(jnp.abs(out3 - ref3)))}")

    # Dispatcher fast path (tiny problem skips pallas_call).
    out4 = jax.block_until_ready(
        concept_similarity_memory_attention(q, mk, mv, params, ew))
    assert jnp.allclose(out4, ref, atol=1e-4, rtol=1e-4)

    print("KERNEL_OK")
</pallas_src>

<mosaic_0001>
module attributes {stable_mosaic.version = 11 : i64} {
  func.func @_attn_kernel(%arg0: i32, %arg1: memref<8x32xf32, #tpu.memory_space<vmem>>, %arg2: memref<64x32xf32, #tpu.memory_space<vmem>>, %arg3: memref<64x32xf32, #tpu.memory_space<vmem>>, %arg4: memref<8x8xf32, #tpu.memory_space<vmem>>, %arg5: memref<32x32xf32, #tpu.memory_space<vmem>>, %arg6: memref<1x32xf32, #tpu.memory_space<vmem>>, %arg7: memref<32x32xf32, #tpu.memory_space<vmem>>, %arg8: memref<1x32xf32, #tpu.memory_space<vmem>>, %arg9: memref<32x32xf32, #tpu.memory_space<vmem>>, %arg10: memref<1x32xf32, #tpu.memory_space<vmem>>, %arg11: memref<8x32xf32, #tpu.memory_space<vmem>>) attributes {dimension_semantics = [#tpu.dimension_semantics<parallel>], iteration_bounds = array<i64: 1>, scalar_prefetch = 0 : i64, scratch_operands = 0 : i64, tpu.core_type = #tpu.core_type<tc>, window_params = [{transform_indices = @transform_0, window_bounds = array<i64: 8, 32>}, {transform_indices = @transform_1, window_bounds = array<i64: 64, 32>}, {transform_indices = @transform_2, window_bounds = array<i64: 64, 32>}, {transform_indices = @transform_3, window_bounds = array<i64: 8, 8>}, {pipeline_mode = #tpu.pipeline_mode<synchronous>, transform_indices = @transform_4, window_bounds = array<i64: 32, 32>}, {pipeline_mode = #tpu.pipeline_mode<synchronous>, transform_indices = @transform_5, window_bounds = array<i64: 1, 32>}, {pipeline_mode = #tpu.pipeline_mode<synchronous>, transform_indices = @transform_6, window_bounds = array<i64: 32, 32>}, {pipeline_mode = #tpu.pipeline_mode<synchronous>, transform_indices = @transform_7, window_bounds = array<i64: 1, 32>}, {pipeline_mode = #tpu.pipeline_mode<synchronous>, transform_indices = @transform_8, window_bounds = array<i64: 32, 32>}, {pipeline_mode = #tpu.pipeline_mode<synchronous>, transform_indices = @transform_9, window_bounds = array<i64: 1, 32>}, {transform_indices = @transform_10, window_bounds = array<i64: 8, 32>}]} {
    %c0 = arith.constant 0 : index
    %c0_0 = arith.constant 0 : index
    %0 = vector.load %arg1[%c0, %c0_0] : memref<8x32xf32, #tpu.memory_space<vmem>>, vector<8x32xf32>
    %c0_1 = arith.constant 0 : index
    %c0_2 = arith.constant 0 : index
    %1 = vector.load %arg5[%c0_1, %c0_2] : memref<32x32xf32, #tpu.memory_space<vmem>>, vector<32x32xf32>
    %cst = arith.constant dense<0.000000e+00> : vector<8x32xf32>
    %2 = tpu.matmul %0, %1, %cst {dimension_numbers = #tpu.dot_dimension_numbers<[1], [1], [0], [0], [0, 0, 1, 0], [], []>} : vector<8x32xf32>, vector<32x32xf32>, vector<8x32xf32> -> vector<8x32xf32>
    %c0_3 = arith.constant 0 : index
    %c0_4 = arith.constant 0 : index
    %3 = vector.load %arg6[%c0_3, %c0_4] : memref<1x32xf32, #tpu.memory_space<vmem>>, vector<1x32xf32>
    %4 = vector.broadcast %3 : vector<1x32xf32> to vector<8x32xf32>
    %5 = arith.addf %2, %4 : vector<8x32xf32>
    %c0_5 = arith.constant 0 : index
    %c0_6 = arith.constant 0 : index
    %6 = vector.load %arg2[%c0_5, %c0_6] : memref<64x32xf32, #tpu.memory_space<vmem>>, vector<64x32xf32>
    %c0_7 = arith.constant 0 : index
    %c0_8 = arith.constant 0 : index
    %7 = vector.load %arg7[%c0_7, %c0_8] : memref<32x32xf32, #tpu.memory_space<vmem>>, vector<32x32xf32>
    %cst_9 = arith.constant dense<0.000000e+00> : vector<64x32xf32>
    %8 = tpu.matmul %6, %7, %cst_9 {dimension_numbers = #tpu.dot_dimension_numbers<[1], [1], [0], [0], [0, 0, 1, 0], [], []>} : vector<64x32xf32>, vector<32x32xf32>, vector<64x32xf32> -> vector<64x32xf32>
    %c0_10 = arith.constant 0 : index
    %c0_11 = arith.constant 0 : index
    %9 = vector.load %arg8[%c0_10, %c0_11] : memref<1x32xf32, #tpu.memory_space<vmem>>, vector<1x32xf32>
    %10 = vector.broadcast %9 : vector<1x32xf32> to vector<64x32xf32>
    %11 = arith.addf %8, %10 : vector<64x32xf32>
    %c0_12 = arith.constant 0 : index
    %c0_13 = arith.constant 0 : index
    %12 = vector.load %arg3[%c0_12, %c0_13] : memref<64x32xf32, #tpu.memory_space<vmem>>, vector<64x32xf32>
    %c0_14 = arith.constant 0 : index
    %c0_15 = arith.constant 0 : index
    %13 = vector.load %arg9[%c0_14, %c0_15] : memref<32x32xf32, #tpu.memory_space<vmem>>, vector<32x32xf32>
    %cst_16 = arith.constant dense<0.000000e+00> : vector<64x32xf32>
    %14 = tpu.matmul %12, %13, %cst_16 {dimension_numbers = #tpu.dot_dimension_numbers<[1], [1], [0], [0], [0, 0, 1, 0], [], []>} : vector<64x32xf32>, vector<32x32xf32>, vector<64x32xf32> -> vector<64x32xf32>
    %c0_17 = arith.constant 0 : index
    %c0_18 = arith.constant 0 : index
    %15 = vector.load %arg10[%c0_17, %c0_18] : memref<1x32xf32, #tpu.memory_space<vmem>>, vector<1x32xf32>
    %16 = vector.broadcast %15 : vector<1x32xf32> to vector<64x32xf32>
    %17 = arith.addf %14, %16 : vector<64x32xf32>
    %18 = vector.shape_cast %11 : vector<64x32xf32> to vector<8x8x32xf32>
    %19 = vector.shape_cast %17 : vector<64x32xf32> to vector<8x8x32xf32>
    %20 = arith.mulf %5, %5 : vector<8x32xf32>
    %cst_19 = arith.constant dense<0.000000e+00> : vector<8xf32>
    %21 = vector.multi_reduction <add>, %20, %cst_19 [1] : vector<8x32xf32> to vector<8xf32>
    %22 = vector.shape_cast %21 : vector<8xf32> to vector<8x1xf32>
    %23 = arith.mulf %18, %18 : vector<8x8x32xf32>
    %cst_20 = arith.constant dense<0.000000e+00> : vector<8x8xf32>
    %24 = vector.multi_reduction <add>, %23, %cst_20 [2] : vector<8x8x32xf32> to vector<8x8xf32>
    %25 = vector.shape_cast %5 : vector<8x32xf32> to vector<8x1x32xf32>
    %26 = vector.broadcast %25 : vector<8x1x32xf32> to vector<8x8x32xf32>
    %27 = arith.mulf %18, %26 : vector<8x8x32xf32>
    %cst_21 = arith.constant dense<0.000000e+00> : vector<8x8xf32>
    %28 = vector.multi_reduction <add>, %27, %cst_21 [2] : vector<8x8x32xf32> to vector<8x8xf32>
    %29 = vector.broadcast %22 : vector<8x1xf32> to vector<8x8xf32>
    %30 = arith.mulf %29, %24 : vector<8x8xf32>
    %cst_22 = arith.constant 1.000000e-16 : f32
    %31 = vector.broadcast %cst_22 : f32 to vector<8x8xf32>
    %32 = arith.maximumf %30, %31 : vector<8x8xf32>
    %33 = math.rsqrt %32 : vector<8x8xf32>
    %34 = arith.mulf %28, %33 : vector<8x8xf32>
    %c0_23 = arith.constant 0 : index
    %c0_24 = arith.constant 0 : index
    %35 = vector.load %arg4[%c0_23, %c0_24] : memref<8x8xf32, #tpu.memory_space<vmem>>, vector<8x8xf32>
    %36 = arith.mulf %34, %35 : vector<8x8xf32>
    %cst_25 = arith.constant dense<0xFF800000> : vector<8xf32>
    %37 = vector.multi_reduction <maximumf>, %36, %cst_25 [1] : vector<8x8xf32> to vector<8xf32>
    %38 = vector.shape_cast %37 : vector<8xf32> to vector<8x1xf32>
    %39 = vector.broadcast %38 : vector<8x1xf32> to vector<8x8xf32>
    %40 = arith.subf %36, %39 : vector<8x8xf32>
    %41 = math.exp %40 : vector<8x8xf32>
    %cst_26 = arith.constant dense<0.000000e+00> : vector<8xf32>
    %42 = vector.multi_reduction <add>, %41, %cst_26 [1] : vector<8x8xf32> to vector<8xf32>
    %43 = vector.shape_cast %42 : vector<8xf32> to vector<8x1xf32>
    %44 = tpu.reciprocal %43 {approx = true} : vector<8x1xf32> -> vector<8x1xf32>
    %45 = arith.mulf %43, %44 : vector<8x1xf32>
    %cst_27 = arith.constant 2.000000e+00 : f32
    %46 = vector.broadcast %cst_27 : f32 to vector<8x1xf32>
    %47 = arith.subf %46, %45 : vector<8x1xf32>
    %48 = arith.mulf %44, %47 : vector<8x1xf32>
    %49 = vector.broadcast %48 : vector<8x1xf32> to vector<8x8xf32>
    %50 = arith.mulf %41, %49 : vector<8x8xf32>
    %51 = vector.shape_cast %50 : vector<8x8xf32> to vector<8x8x1xf32>
    %52 = vector.broadcast %51 : vector<8x8x1xf32> to vector<8x8x32xf32>
    %53 = arith.mulf %52, %19 : vector<8x8x32xf32>
    %cst_28 = arith.constant dense<0.000000e+00> : vector<8x32xf32>
    %54 = vector.multi_reduction <add>, %53, %cst_28 [1] : vector<8x8x32xf32> to vector<8x32xf32>
    %c0_29 = arith.constant 0 : index
    %c0_30 = arith.constant 0 : index
    %55 = vector.load %arg11[%c0_29, %c0_30] : memref<8x32xf32, #tpu.memory_space<vmem>>, vector<8x32xf32>
    tpu.vector_store %arg11[%c0_29, %c0_30], %54 {strides = array<i32>} : memref<8x32xf32, #tpu.memory_space<vmem>>, vector<8x32xf32>,
    return
  }
  func.func @transform_0(%arg0: i32) -> (i32, i32) {
    %c0_i32 = arith.constant 0 : i32
    %c0_i32_0 = arith.constant 0 : i32
    return %arg0, %c0_i32 : i32, i32
  }
  func.func @transform_1(%arg0: i32) -> (i32, i32) {
    %c0_i32 = arith.constant 0 : i32
    %c0_i32_0 = arith.constant 0 : i32
    return %arg0, %c0_i32 : i32, i32
  }
  func.func @transform_2(%arg0: i32) -> (i32, i32) {
    %c0_i32 = arith.constant 0 : i32
    %c0_i32_0 = arith.constant 0 : i32
    return %arg0, %c0_i32 : i32, i32
  }
  func.func @transform_3(%arg0: i32) -> (i32, i32) {
    %c0_i32 = arith.constant 0 : i32
    %c0_i32_0 = arith.constant 0 : i32
    return %arg0, %c0_i32 : i32, i32
  }
  func.func @transform_4(%arg0: i32) -> (i32, i32) {
    %c0_i32 = arith.constant 0 : i32
    %c0_i32_0 = arith.constant 0 : i32
    %c0_i32_1 = arith.constant 0 : i32
    return %c0_i32, %c0_i32_0 : i32, i32
  }
  func.func @transform_5(%arg0: i32) -> (i32, i32) {
    %c0_i32 = arith.constant 0 : i32
    %c0_i32_0 = arith.constant 0 : i32
    %c0_i32_1 = arith.constant 0 : i32
    return %c0_i32, %c0_i32_0 : i32, i32
  }
  func.func @transform_6(%arg0: i32) -> (i32, i32) {
    %c0_i32 = arith.constant 0 : i32
    %c0_i32_0 = arith.constant 0 : i32
    %c0_i32_1 = arith.constant 0 : i32
    return %c0_i32, %c0_i32_0 : i32, i32
  }
  func.func @transform_7(%arg0: i32) -> (i32, i32) {
    %c0_i32 = arith.constant 0 : i32
    %c0_i32_0 = arith.constant 0 : i32
    %c0_i32_1 = arith.constant 0 : i32
    return %c0_i32, %c0_i32_0 : i32, i32
  }
  func.func @transform_8(%arg0: i32) -> (i32, i32) {
    %c0_i32 = arith.constant 0 : i32
    %c0_i32_0 = arith.constant 0 : i32
    %c0_i32_1 = arith.constant 0 : i32
    return %c0_i32, %c0_i32_0 : i32, i32
  }
  func.func @transform_9(%arg0: i32) -> (i32, i32) {
    %c0_i32 = arith.constant 0 : i32
    %c0_i32_0 = arith.constant 0 : i32
    %c0_i32_1 = arith.constant 0 : i32
    return %c0_i32, %c0_i32_0 : i32, i32
  }
  func.func @transform_10(%arg0: i32) -> (i32, i32) {
    %c0_i32 = arith.constant 0 : i32
    %c0_i32_0 = arith.constant 0 : i32
    return %arg0, %c0_i32 : i32, i32
  }
}

</mosaic_0001>

<llo_original>
// kernel: concept_similarity_memory_attention.1
$region0: #{concept_similarity_memory_attention.1}
  #allocation0 [shape = 'u32[]', space=smem, size = 0x4, offset = 0x4, fixed_abs, tag = 'smem constant byte address 0x4 - core index']
  #allocation1 [shape = 'u32[144,128]{1,0:T(1,128)}', space=vmem, size = 0x12000, scoped, tag = 'internal scratch']
  %s0 = inlined_call_operand.vmem [shape: f32[8,32], index: 0, kind: input, shape index: {}]
  %s1 = inlined_call_operand.vmem [shape: f32[64,32], index: 1, kind: input, shape index: {}]
  %s2 = inlined_call_operand.vmem [shape: f32[64,32], index: 2, kind: input, shape index: {}]
  %s3 = inlined_call_operand.vmem [shape: f32[8,8], index: 3, kind: input, shape index: {}]
  %s4 = inlined_call_operand.vmem [shape: f32[32,32], index: 4, kind: input, shape index: {}]
  %s5 = inlined_call_operand.vmem [shape: f32[1,32], index: 5, kind: input, shape index: {}]
  %s6 = inlined_call_operand.vmem [shape: f32[32,32], index: 6, kind: input, shape index: {}]
  %s7 = inlined_call_operand.vmem [shape: f32[1,32], index: 7, kind: input, shape index: {}]
  %s8 = inlined_call_operand.vmem [shape: f32[32,32], index: 8, kind: input, shape index: {}]
  %s9 = inlined_call_operand.vmem [shape: f32[1,32], index: 9, kind: input, shape index: {}]
  %s10 = inlined_call_operand.vmem [shape: f32[8,32], index: 10, kind: output, shape index: {}]
  %s11 = sld [smem:[#allocation0]]
  $region50: #{concept_similarity_memory_attention.1} parent=0
    _
  %s13 = ssub.s32 1, %s11
  %s14 = scalar_select 0, %s13, %s11
  // Predicated region
  $region2: #{concept_similarity_memory_attention.1} parent=0 // pred_check
    _
  $region3: #{concept_similarity_memory_attention.1} parent=0 // pred_check_branch
    %16 = sbr.rel (0) target = $region5
  $region4: #{concept_similarity_memory_attention.1} parent=0 // pred_region
    _
  $region5: #{concept_similarity_memory_attention.1} parent=0 // pred_fallthru
    _
  // Predicated region
  $region6: #{concept_similarity_memory_attention.1} parent=0 // pred_check
    _
  $region7: #{concept_similarity_memory_attention.1} parent=0 // pred_check_branch
    %18 = sbr.rel (0) target = $region9
  $region8: #{concept_similarity_memory_attention.1} parent=0 // pred_region
    _
  $region9: #{concept_similarity_memory_attention.1} parent=0 // pred_fallthru
    _
  // Predicated region
  $region10: #{concept_similarity_memory_attention.1} parent=0 // pred_check
    _
  $region11: #{concept_similarity_memory_attention.1} parent=0 // pred_check_branch
    %20 = sbr.rel (0) target = $region13
  $region12: #{concept_similarity_memory_attention.1} parent=0 // pred_region
    _
  $region13: #{concept_similarity_memory_attention.1} parent=0 // pred_fallthru
    _
  // Predicated region
  $region14: #{concept_similarity_memory_attention.1} parent=0 // pred_check
    _
  $region15: #{concept_similarity_memory_attention.1} parent=0 // pred_check_branch
    %22 = sbr.rel (0) target = $region17
  $region16: #{concept_similarity_memory_attention.1} parent=0 // pred_region
    _
  $region17: #{concept_similarity_memory_attention.1} parent=0 // pred_fallthru
    _
  // Predicated region
  $region18: #{concept_similarity_memory_attention.1} parent=0 // pred_check
    _
  $region19: #{concept_similarity_memory_attention.1} parent=0 // pred_check_branch
    %24 = sbr.rel (0) target = $region21
  $region20: #{concept_similarity_memory_attention.1} parent=0 // pred_region
    _
  $region21: #{concept_similarity_memory_attention.1} parent=0 // pred_fallthru
    _
  // Predicated region
  $region22: #{concept_similarity_memory_attention.1} parent=0 // pred_check
    _
  $region23: #{concept_similarity_memory_attention.1} parent=0 // pred_check_branch
    %26 = sbr.rel (0) target = $region25
  $region24: #{concept_similarity_memory_attention.1} parent=0 // pred_region
    _
  $region25: #{concept_similarity_memory_attention.1} parent=0 // pred_fallthru
    _
  // Predicated region
  $region26: #{concept_similarity_memory_attention.1} parent=0 // pred_check
    _
  $region27: #{concept_similarity_memory_attention.1} parent=0 // pred_check_branch
    %28 = sbr.rel (0) target = $region29
  $region28: #{concept_similarity_memory_attention.1} parent=0 // pred_region
    _
  $region29: #{concept_similarity_memory_attention.1} parent=0 // pred_fallthru
    _
  // Predicated region
  $region30: #{concept_similarity_memory_attention.1} parent=0 // pred_check
    _
  $region31: #{concept_similarity_memory_attention.1} parent=0 // pred_check_branch
    %30 = sbr.rel (0) target = $region33
  $region32: #{concept_similarity_memory_attention.1} parent=0 // pred_region
    _
  $region33: #{concept_similarity_memory_attention.1} parent=0 // pred_fallthru
    _
  // Predicated region
  $region34: #{concept_similarity_memory_attention.1} parent=0 // pred_check
    _
  $region35: #{concept_similarity_memory_attention.1} parent=0 // pred_check_branch
    %32 = sbr.rel (0) target = $region37
  $region36: #{concept_similarity_memory_attention.1} parent=0 // pred_region
    _
  $region37: #{concept_similarity_memory_attention.1} parent=0 // pred_fallthru
    _
  // Predicated region
  $region38: #{concept_similarity_memory_attention.1} parent=0 // pred_check
    _
  $region39: #{concept_similarity_memory_attention.1} parent=0 // pred_check_branch
    %34 = sbr.rel (0) target = $region41
  $region40: #{concept_similarity_memory_attention.1} parent=0 // pred_region
    _
  $region41: #{concept_similarity_memory_attention.1} parent=0 // pred_fallthru
    _
  %v35 = vld [vmem:[%s0] sm:$0xff]
  %v36 = vld [vmem:[%s4] sm:$0xff]
  %v37 = vld [vmem:[%s4 + $0x8] sm:$0xff]
  %v38 = vld [vmem:[%s4 + $0x10] sm:$0xff]
  %v39 = vld [vmem:[%s4 + $0x18] sm:$0xff]
  %v40 = vld [vmem:[%s5] sm:$0x1]
  %v42 = vlaneseq
  %v43 = vshrl.u32 %v42, 7
  %v44 = vsub.s32 0, %v43
  %v45 = vrot.slane %v40, %v44
  %vm47 = vcmask 261120
  %v49 = vsel %vm47, %v35, 0
  %v52 = vsel %vm47, %v36, 0
  %v55 = vsel %vm47, %v37, 0
  %v58 = vsel %vm47, %v38, 0
  %v61 = vsel %vm47, %v39, 0
  %63 = vmatprep.subr.mxu0 0.0
  %64 = vmatpush1.xpose.msra.mxu0 %v52
  %65 = vmatprep.subr.mxu0 0.0
  %66 = vmatpush1.xpose.msra.mxu0 %v55
  %67 = vmatprep.subr.mxu0 0.0
  %68 = vmatpush1.xpose.msra.mxu0 %v58
  %69 = vmatprep.subr.mxu0 0.0
  %70 = vmatpush1.xpose.msra.mxu0 %v61
  %71 = vmatprep.subr.mxu0 0.0
  %72 = vmatpush1.xpose.msra.mxu0 0.0
  %73 = vmatprep.subr.mxu0 0.0
  %74 = vmatpush1.xpose.msra.mxu0 0.0
  %75 = vmatprep.subr.mxu0 0.0
  %76 = vmatpush1.xpose.msra.mxu0 0.0
  %77 = vmatprep.subr.mxu0 0.0
  %78 = vmatpush1.xpose.msra.mxu0 0.0
  %79 = vmatprep.subr.mxu0 0.0
  %80 = vmatpush1.xpose.msra.mxu0 0.0
  %81 = vmatprep.subr.mxu0 0.0
  %82 = vmatpush1.xpose.msra.mxu0 0.0
  %83 = vmatprep.subr.mxu0 0.0
  %84 = vmatpush1.xpose.msra.mxu0 0.0
  %85 = vmatprep.subr.mxu0 0.0
  %86 = vmatpush1.xpose.msra.mxu0 0.0
  %87 = vmatprep.subr.mxu0 0.0
  %88 = vmatpush1.xpose.msra.mxu0 0.0
  %89 = vmatprep.subr.mxu0 0.0
  %90 = vmatpush1.xpose.msra.mxu0 0.0
  %91 = vmatprep.subr.mxu0 0.0
  %92 = vmatpush1.xpose.msra.mxu0 0.0
  %93 = vmatprep.subr.mxu0 0.0
  %94 = vmatpush1.xpose.msra.mxu0 0.0
  %95 = vmatprep.subr.mxu0 0.0
  %96 = vmatpush1.xpose.msra.mxu0 0.0
  %97 = vmatprep.subr.mxu0 0.0
  %98 = vmatpush1.xpose.msra.mxu0 0.0
  %99 = vmatprep.subr.mxu0 0.0
  %100 = vmatpush1.xpose.msra.mxu0 0.0
  %101 = vmatprep.subr.mxu0 0.0
  %102 = vmatpush1.xpose.msra.mxu0 0.0
  %103 = vmatprep.subr.mxu0 0.0
  %104 = vmatpush1.xpose.msra.mxu0 0.0
  %105 = vmatprep.subr.mxu0 0.0
  %106 = vmatpush1.xpose.msra.mxu0 0.0
  %107 = vmatprep.subr.mxu0 0.0
  %108 = vmatpush1.xpose.msra.mxu0 0.0
  %109 = vmatprep.subr.mxu0 0.0
  %110 = vmatpush1.xpose.msra.mxu0 0.0
  %111 = vmatprep.subr.mxu0 0.0
  %112 = vmatpush1.xpose.msra.mxu0 0.0
  %113 = vmatprep.subr.mxu0 0.0
  %114 = vmatpush1.xpose.msra.mxu0 0.0
  %115 = vmatprep.subr.mxu0 0.0
  %116 = vmatpush1.xpose.msra.mxu0 0.0
  %117 = vmatprep.subr.mxu0 0.0
  %118 = vmatpush1.xpose.msra.mxu0 0.0
  %119 = vmatprep.subr.mxu0 0.0
  %120 = vmatpush1.xpose.msra.mxu0 0.0
  %121 = vmatprep.subr.mxu0 0.0
  %122 = vmatpush1.xpose.msra.mxu0 0.0
  %123 = vmatprep.subr.mxu0 0.0
  %124 = vmatpush1.xpose.msra.mxu0 0.0
  %125 = vmatprep.subr.mxu0 0.0
  %126 = vmatpush1.xpose.msra.mxu0 0.0
  %127 = vmatprep.mubr.f32.mxu0 0.0
  %128 = vmatmul.mubr.f32.gmra.mrb[0].mxu0 %v49
  %v129 = vpop.f32.mrb[0].mxu0
  %v130 = vadd.f32 %v45, %v129
  %v131 = vpop.f32.mrb[0].mxu0
  %132 = vdwg.mxu0
  %v133 = vld [vmem:[%s1] sm:$0xff]
  %v134 = vld [vmem:[%s1 + $0x8] sm:$0xff]
  %v135 = vld [vmem:[%s1 + $0x10] sm:$0xff]
  %v136 = vld [vmem:[%s1 + $0x18] sm:$0xff]
  %v137 = vld [vmem:[%s1 + $0x20] sm:$0xff]
  %v138 = vld [vmem:[%s1 + $0x28] sm:$0xff]
  %v139 = vld [vmem:[%s1 + $0x30] sm:$0xff]
  %v140 = vld [vmem:[%s1 + $0x38] sm:$0xff]
  %v141 = vld [vmem:[%s6] sm:$0xff]
  %v142 = vld [vmem:[%s6 + $0x8] sm:$0xff]
  %v143 = vld [vmem:[%s6 + $0x10] sm:$0xff]
  %v144 = vld [vmem:[%s6 + $0x18] sm:$0xff]
  %v145 = vld [vmem:[%s7] sm:$0x1]
  %v147 = vlaneseq
  %v148 = vshrl.u32 %v147, 7
  %v149 = vsub.s32 0, %v148
  %v150 = vrot.slane %v145, %v149
  %v153 = vsel %vm47, %v133, 0
  %v156 = vsel %vm47, %v134, 0
  %v159 = vsel %vm47, %v135, 0
  %v162 = vsel %vm47, %v136, 0
  %v165 = vsel %vm47, %v137, 0
  %v168 = vsel %vm47, %v138, 0
  %v171 = vsel %vm47, %v139, 0
  %v174 = vsel %vm47, %v140, 0
  %v177 = vsel %vm47, %v141, 0
  %v180 = vsel %vm47, %v142, 0
  %v183 = vsel %vm47, %v143, 0
  %v186 = vsel %vm47, %v144, 0
  %188 = vmatprep.subr.mxu0 0.0
  %189 = vmatpush1.xpose.msra.mxu0 %v177
  %190 = vmatprep.subr.mxu0 0.0
  %191 = vmatpush1.xpose.msra.mxu0 %v180
  %192 = vmatprep.subr.mxu0 0.0
  %193 = vmatpush1.xpose.msra.mxu0 %v183
  %194 = vmatprep.subr.mxu0 0.0
  %195 = vmatpush1.xpose.msra.mxu0 %v186
  %196 = vmatprep.subr.mxu0 0.0
  %197 = vmatpush1.xpose.msra.mxu0 0.0
  %198 = vmatprep.subr.mxu0 0.0
  %199 = vmatpush1.xpose.msra.mxu0 0.0
  %200 = vmatprep.subr.mxu0 0.0
  %201 = vmatpush1.xpose.msra.mxu0 0.0
  %202 = vmatprep.subr.mxu0 0.0
  %203 = vmatpush1.xpose.msra.mxu0 0.0
  %204 = vmatprep.subr.mxu0 0.0
  %205 = vmatpush1.xpose.msra.mxu0 0.0
  %206 = vmatprep.subr.mxu0 0.0
  %207 = vmatpush1.xpose.msra.mxu0 0.0
  %208 = vmatprep.subr.mxu0 0.0
  %209 = vmatpush1.xpose.msra.mxu0 0.0
  %210 = vmatprep.subr.mxu0 0.0
  %211 = vmatpush1.xpose.msra.mxu0 0.0
  %212 = vmatprep.subr.mxu0 0.0
  %213 = vmatpush1.xpose.msra.mxu0 0.0
  %214 = vmatprep.subr.mxu0 0.0
  %215 = vmatpush1.xpose.msra.mxu0 0.0
  %216 = vmatprep.subr.mxu0 0.0
  %217 = vmatpush1.xpose.msra.mxu0 0.0
  %218 = vmatprep.subr.mxu0 0.0
  %219 = vmatpush1.xpose.msra.mxu0 0.0
  %220 = vmatprep.subr.mxu0 0.0
  %221 = vmatpush1.xpose.msra.mxu0 0.0
  %222 = vmatprep.subr.mxu0 0.0
  %223 = vmatpush1.xpose.msra.mxu0 0.0
  %224 = vmatprep.subr.mxu0 0.0
  %225 = vmatpush1.xpose.msra.mxu0 0.0
  %226 = vmatprep.subr.mxu0 0.0
  %227 = vmatpush1.xpose.msra.mxu0 0.0
  %228 = vmatprep.subr.mxu0 0.0
  %229 = vmatpush1.xpose.msra.mxu0 0.0
  %230 = vmatprep.subr.mxu0 0.0
  %231 = vmatpush1.xpose.msra.mxu0 0.0
  %232 = vmatprep.subr.mxu0 0.0
  %233 = vmatpush1.xpose.msra.mxu0 0.0
  %234 = vmatprep.subr.mxu0 0.0
  %235 = vmatpush1.xpose.msra.mxu0 0.0
  %236 = vmatprep.subr.mxu0 0.0
  %237 = vmatpush1.xpose.msra.mxu0 0.0
  %238 = vmatprep.subr.mxu0 0.0
  %239 = vmatpush1.xpose.msra.mxu0 0.0
  %240 = vmatprep.subr.mxu0 0.0
  %241 = vmatpush1.xpose.msra.mxu0 0.0
  %242 = vmatprep.subr.mxu0 0.0
  %243 = vmatpush1.xpose.msra.mxu0 0.0
  %244 = vmatprep.subr.mxu0 0.0
  %245 = vmatpush1.xpose.msra.mxu0 0.0
  %246 = vmatprep.subr.mxu0 0.0
  %247 = vmatpush1.xpose.msra.mxu0 0.0
  %248 = vmatprep.subr.mxu0 0.0
  %249 = vmatpush1.xpose.msra.mxu0 0.0
  %250 = vmatprep.subr.mxu0 0.0
  %251 = vmatpush1.xpose.msra.mxu0 0.0
  %252 = vmatprep.mubr.f32.mxu0 0.0
  %253 = vmatmul.mubr.f32.gmra.mrb[0].mxu0 %v153
  %v254 = vpop.f32.mrb[0].mxu0
  %v255 = vadd.f32 %v150, %v254
  %v256 = vpop.f32.mrb[0].mxu0
  %257 = vmatprep.mubr.f32.mxu0 0.0
  %258 = vmatmul.mubr.f32.gmra.mrb[0].mxu0 %v156
  %v259 = vpop.f32.mrb[0].mxu0
  %v260 = vadd.f32 %v150, %v259
  %v261 = vpop.f32.mrb[0].mxu0
  %262 = vmatprep.mubr.f32.mxu0 0.0
  %263 = vmatmul.mubr.f32.gmra.mrb[0].mxu0 %v159
  %v264 = vpop.f32.mrb[0].mxu0
  %v265 = vadd.f32 %v150, %v264
  %v266 = vpop.f32.mrb[0].mxu0
  %267 = vmatprep.mubr.f32.mxu0 0.0
  %268 = vmatmul.mubr.f32.gmra.mrb[0].mxu0 %v162
  %v269 = vpop.f32.mrb[0].mxu0
  %v270 = vadd.f32 %v150, %v269
  %v271 = vpop.f32.mrb[0].mxu0
  %272 = vmatprep.mubr.f32.mxu0 0.0
  %273 = vmatmul.mubr.f32.gmra.mrb[0].mxu0 %v165
  %v274 = vpop.f32.mrb[0].mxu0
  %v275 = vadd.f32 %v150, %v274
  %v276 = vpop.f32.mrb[0].mxu0
  %277 = vmatprep.mubr.f32.mxu0 0.0
  %278 = vmatmul.mubr.f32.gmra.mrb[0].mxu0 %v168
  %v279 = vpop.f32.mrb[0].mxu0
  %v280 = vadd.f32 %v150, %v279
  %v281 = vpop.f32.mrb[0].mxu0
  %282 = vmatprep.mubr.f32.mxu0 0.0
  %283 = vmatmul.mubr.f32.gmra.mrb[0].mxu0 %v171
  %v284 = vpop.f32.mrb[0].mxu0
  %v285 = vadd.f32 %v150, %v284
  %v286 = vpop.f32.mrb[0].mxu0
  %287 = vmatprep.mubr.f32.mxu0 0.0
  %288 = vmatmul.mubr.f32.gmra.mrb[0].mxu0 %v174
  %v289 = vpop.f32.mrb[0].mxu0
  %v290 = vadd.f32 %v150, %v289
  %v291 = vpop.f32.mrb[0].mxu0
  %292 = vdwg.mxu0
  %v293 = vld [vmem:[%s2] sm:$0xff]
  %v294 = vld [vmem:[%s2 + $0x8] sm:$0xff]
  %v295 = vld [vmem:[%s2 + $0x10] sm:$0xff]
  %v296 = vld [vmem:[%s2 + $0x18] sm:$0xff]
  %v297 = vld [vmem:[%s2 + $0x20] sm:$0xff]
  %v298 = vld [vmem:[%s2 + $0x28] sm:$0xff]
  %v299 = vld [vmem:[%s2 + $0x30] sm:$0xff]
  %v300 = vld [vmem:[%s2 + $0x38] sm:$0xff]
  %v301 = vld [vmem:[%s8] sm:$0xff]
  %v302 = vld [vmem:[%s8 + $0x8] sm:$0xff]
  %v303 = vld [vmem:[%s8 + $0x10] sm:$0xff]
  %v304 = vld [vmem:[%s8 + $0x18] sm:$0xff]
  %v305 = vld [vmem:[%s9] sm:$0x1]
  %v307 = vlaneseq
  %v308 = vshrl.u32 %v307, 7
  %v309 = vsub.s32 0, %v308
  %v310 = vrot.slane %v305, %v309
  %v313 = vsel %vm47, %v293, 0
  %v316 = vsel %vm47, %v294, 0
  %v319 = vsel %vm47, %v295, 0
  %v322 = vsel %vm47, %v296, 0
  %v325 = vsel %vm47, %v297, 0
  %v328 = vsel %vm47, %v298, 0
  %v331 = vsel %vm47, %v299, 0
  %v334 = vsel %vm47, %v300, 0
  %v337 = vsel %vm47, %v301, 0
  %v340 = vsel %vm47, %v302, 0
  %v343 = vsel %vm47, %v303, 0
  %v346 = vsel %vm47, %v304, 0
  %348 = vmatprep.subr.mxu0 0.0
  %349 = vmatpush1.xpose.msra.mxu0 %v337
  %350 = vmatprep.subr.mxu0 0.0
  %351 = vmatpush1.xpose.msra.mxu0 %v340
  %352 = vmatprep.subr.mxu0 0.0
  %353 = vmatpush1.xpose.msra.mxu0 %v343
  %354 = vmatprep.subr.mxu0 0.0
  %355 = vmatpush1.xpose.msra.mxu0 %v346
  %356 = vmatprep.subr.mxu0 0.0
  %357 = vmatpush1.xpose.msra.mxu0 0.0
  %358 = vmatprep.subr.mxu0 0.0
  %359 = vmatpush1.xpose.msra.mxu0 0.0
  %360 = vmatprep.subr.mxu0 0.0
  %361 = vmatpush1.xpose.msra.mxu0 0.0
  %362 = vmatprep.subr.mxu0 0.0
  %363 = vmatpush1.xpose.msra.mxu0 0.0
  %364 = vmatprep.subr.mxu0 0.0
  %365 = vmatpush1.xpose.msra.mxu0 0.0
  %366 = vmatprep.subr.mxu0 0.0
  %367 = vmatpush1.xpose.msra.mxu0 0.0
  %368 = vmatprep.subr.mxu0 0.0
  %369 = vmatpush1.xpose.msra.mxu0 0.0
  %370 = vmatprep.subr.mxu0 0.0
  %371 = vmatpush1.xpose.msra.mxu0 0.0
  %372 = vmatprep.subr.mxu0 0.0
  %373 = vmatpush1.xpose.msra.mxu0 0.0
  %374 = vmatprep.subr.mxu0 0.0
  %375 = vmatpush1.xpose.msra.mxu0 0.0
  %376 = vmatprep.subr.mxu0 0.0
  %377 = vmatpush1.xpose.msra.mxu0 0.0
  %378 = vmatprep.subr.mxu0 0.0
  %379 = vmatpush1.xpose.msra.mxu0 0.0
  %380 = vmatprep.subr.mxu0 0.0
  %381 = vmatpush1.xpose.msra.mxu0 0.0
  %382 = vmatprep.subr.mxu0 0.0
  %383 = vmatpush1.xpose.msra.mxu0 0.0
  %384 = vmatprep.subr.mxu0 0.0
  %385 = vmatpush1.xpose.msra.mxu0 0.0
  %386 = vmatprep.subr.mxu0 0.0
  %387 = vmatpush1.xpose.msra.mxu0 0.0
  %388 = vmatprep.subr.mxu0 0.0
  %389 = vmatpush1.xpose.msra.mxu0 0.0
  %390 = vmatprep.subr.mxu0 0.0
  %391 = vmatpush1.xpose.msra.mxu0 0.0
  %392 = vmatprep.subr.mxu0 0.0
  %393 = vmatpush1.xpose.msra.mxu0 0.0
  %394 = vmatprep.subr.mxu0 0.0
  %395 = vmatpush1.xpose.msra.mxu0 0.0
  %396 = vmatprep.subr.mxu0 0.0
  %397 = vmatpush1.xpose.msra.mxu0 0.0
  %398 = vmatprep.subr.mxu0 0.0
  %399 = vmatpush1.xpose.msra.mxu0 0.0
  %400 = vmatprep.subr.mxu0 0.0
  %401 = vmatpush1.xpose.msra.mxu0 0.0
  %402 = vmatprep.subr.mxu0 0.0
  %403 = vmatpush1.xpose.msra.mxu0 0.0
  %404 = vmatprep.subr.mxu0 0.0
  %405 = vmatpush1.xpose.msra.mxu0 0.0
  %406 = vmatprep.subr.mxu0 0.0
  %407 = vmatpush1.xpose.msra.mxu0 0.0
  %408 = vmatprep.subr.mxu0 0.0
  %409 = vmatpush1.xpose.msra.mxu0 0.0
  %410 = vmatprep.subr.mxu0 0.0
  %411 = vmatpush1.xpose.msra.mxu0 0.0
  %412 = vmatprep.mubr.f32.mxu0 0.0
  %413 = vmatmul.mubr.f32.gmra.mrb[0].mxu0 %v313
  %v414 = vpop.f32.mrb[0].mxu0
  %v415 = vadd.f32 %v310, %v414
  %v416 = vpop.f32.mrb[0].mxu0
  %417 = vmatprep.mubr.f32.mxu0 0.0
  %418 = vmatmul.mubr.f32.gmra.mrb[0].mxu0 %v316
  %v419 = vpop.f32.mrb[0].mxu0
  %v420 = vadd.f32 %v310, %v419
  %v421 = vpop.f32.mrb[0].mxu0
  %422 = vmatprep.mubr.f32.mxu0 0.0
  %423 = vmatmul.mubr.f32.gmra.mrb[0].mxu0 %v319
  %v424 = vpop.f32.mrb[0].mxu0
  %v425 = vadd.f32 %v310, %v424
  %v426 = vpop.f32.mrb[0].mxu0
  %427 = vmatprep.mubr.f32.mxu0 0.0
  %428 = vmatmul.mubr.f32.gmra.mrb[0].mxu0 %v322
  %v429 = vpop.f32.mrb[0].mxu0
  %v430 = vadd.f32 %v310, %v429
  %v431 = vpop.f32.mrb[0].mxu0
  %432 = vmatprep.mubr.f32.mxu0 0.0
  %433 = vmatmul.mubr.f32.gmra.mrb[0].mxu0 %v325
  %v434 = vpop.f32.mrb[0].mxu0
  %v435 = vadd.f32 %v310, %v434
  %v436 = vpop.f32.mrb[0].mxu0
  %437 = vmatprep.mubr.f32.mxu0 0.0
  %438 = vmatmul.mubr.f32.gmra.mrb[0].mxu0 %v328
  %v439 = vpop.f32.mrb[0].mxu0
  %v440 = vadd.f32 %v310, %v439
  %v441 = vpop.f32.mrb[0].mxu0
  %442 = vmatprep.mubr.f32.mxu0 0.0
  %443 = vmatmul.mubr.f32.gmra.mrb[0].mxu0 %v331
  %v444 = vpop.f32.mrb[0].mxu0
  %v445 = vadd.f32 %v310, %v444
  %v446 = vpop.f32.mrb[0].mxu0
  %447 = vmatprep.mubr.f32.mxu0 0.0
  %448 = vmatmul.mubr.f32.gmra.mrb[0].mxu0 %v334
  %v449 = vpop.f32.mrb[0].mxu0
  %v450 = vadd.f32 %v310, %v449
  %v451 = vpop.f32.mrb[0].mxu0
  %452 = vdwg.mxu0
  %v453 = vmul.f32 %v130, %v130
  %v454 = vsel %vm47, %v453, 0.0
  %455 = vadd.xlane.f32.xlu0 %v454
  %v456 = vpop.xlane.xlu0 %455
  %v457 = vmul.f32 %v255, %v255
  %v458 = vmul.f32 %v260, %v260
  %v459 = vmul.f32 %v265, %v265
  %v460 = vmul.f32 %v270, %v270
  %v461 = vmul.f32 %v275, %v275
  %v462 = vmul.f32 %v280, %v280
  %v463 = vmul.f32 %v285, %v285
  %v464 = vmul.f32 %v290, %v290
  %v465 = vsel %vm47, %v457, 0.0
  %466 = vadd.xlane.f32.xlu0 %v465
  %v467 = vpop.xlane.xlu0 %466
  %v468 = vsel %vm47, %v458, 0.0
  %469 = vadd.xlane.f32.xlu0 %v468
  %v470 = vpop.xlane.xlu0 %469
  %v471 = vsel %vm47, %v459, 0.0
  %472 = vadd.xlane.f32.xlu0 %v471
  %v473 = vpop.xlane.xlu0 %472
  %v474 = vsel %vm47, %v460, 0.0
  %475 = vadd.xlane.f32.xlu0 %v474
  %v476 = vpop.xlane.xlu0 %475
  %v477 = vsel %vm47, %v461, 0.0
  %478 = vadd.xlane.f32.xlu0 %v477
  %v479 = vpop.xlane.xlu0 %478
  %v480 = vsel %vm47, %v462, 0.0
  %481 = vadd.xlane.f32.xlu0 %v480
  %v482 = vpop.xlane.xlu0 %481
  %v483 = vsel %vm47, %v463, 0.0
  %484 = vadd.xlane.f32.xlu0 %v483
  %v485 = vpop.xlane.xlu0 %484
  %v486 = vsel %vm47, %v464, 0.0
  %487 = vadd.xlane.f32.xlu0 %v486
  %v488 = vpop.xlane.xlu0 %487
  %v490 = vcombine.high %v130, %v130
  %v492 = vunpack.c.l.s4 1966171168
  %v493 = vunpack.c.0.s8 %v492
  %v494 = vlaneseq
  %v495 = vshrl.u32 %v494, 7
  %v496 = vsub.s32 %v493, %v495
  %v497 = vrot.slane %v130, %v496
  %v499 = vunpack.c.l.s4 1966171168
  %v500 = vunpack.c.0.s8 %v499
  %v501 = vlaneseq
  %v502 = vshrl.u32 %v501, 7
  %v503 = vsub.s32 %v500, %v502
  %v504 = vrot.slane %v490, %v503
  %v505 = vcombine.high %v497, %v497
  %v506 = vcombine.high %v504, %v504
  %v508 = vunpack.c.l.s4 1966171168
  %v509 = vunpack.c.0.s8 %v508
  %v510 = vlaneseq
  %v511 = vshrl.u32 %v510, 7
  %v512 = vsub.s32 %v509, %v511
  %v513 = vrot.slane %v497, %v512
  %v515 = vunpack.c.l.s4 1966171168
  %v516 = vunpack.c.0.s8 %v515
  %v517 = vlaneseq
  %v518 = vshrl.u32 %v517, 7
  %v519 = vsub.s32 %v516, %v518
  %v520 = vrot.slane %v504, %v519
  %v522 = vunpack.c.l.s4 1966171168
  %v523 = vunpack.c.0.s8 %v522
  %v524 = vlaneseq
  %v525 = vshrl.u32 %v524, 7
  %v526 = vsub.s32 %v523, %v525
  %v527 = vrot.slane %v505, %v526
  %v529 = vunpack.c.l.s4 1966171168
  %v530 = vunpack.c.0.s8 %v529
  %v531 = vlaneseq
  %v532 = vshrl.u32 %v531, 7
  %v533 = vsub.s32 %v530, %v532
  %v534 = vrot.slane %v506, %v533
  %v535 = vcombine.high %v513, %v513
  %v536 = vcombine.high %v520, %v520
  %v537 = vcombine.high %v527, %v527
  %v538 = vcombine.high %v534, %v534
  %v539 = vlaneseq
  %v540 = vshrl.u32 %v539, 7
  %v541 = vsub.s32 0, %v540
  %v542 = vrot.slane %v513, %v541
  %v543 = vlaneseq
  %v544 = vshrl.u32 %v543, 7
  %v545 = vsub.s32 0, %v544
  %v546 = vrot.slane %v527, %v545
  %v547 = vlaneseq
  %v548 = vshrl.u32 %v547, 7
  %v549 = vsub.s32 0, %v548
  %v550 = vrot.slane %v535, %v549
  %v551 = vlaneseq
  %v552 = vshrl.u32 %v551, 7
  %v553 = vsub.s32 0, %v552
  %v554 = vrot.slane %v537, %v553
  %v555 = vlaneseq
  %v556 = vshrl.u32 %v555, 7
  %v557 = vsub.s32 0, %v556
  %v558 = vrot.slane %v520, %v557
  %v559 = vlaneseq
  %v560 = vshrl.u32 %v559, 7
  %v561 = vsub.s32 0, %v560
  %v562 = vrot.slane %v534, %v561
  %v563 = vlaneseq
  %v564 = vshrl.u32 %v563, 7
  %v565 = vsub.s32 0, %v564
  %v566 = vrot.slane %v536, %v565
  %v567 = vlaneseq
  %v568 = vshrl.u32 %v567, 7
  %v569 = vsub.s32 0, %v568
  %v570 = vrot.slane %v538, %v569
  %v579 = vmul.f32 %v255, %v542
  %v580 = vmul.f32 %v260, %v546
  %v581 = vmul.f32 %v265, %v550
  %v582 = vmul.f32 %v270, %v554
  %v583 = vmul.f32 %v275, %v558
  %v584 = vmul.f32 %v280, %v562
  %v585 = vmul.f32 %v285, %v566
  %v586 = vmul.f32 %v290, %v570
  %v587 = vsel %vm47, %v579, 0.0
  %588 = vadd.xlane.f32.xlu0 %v587
  %v589 = vpop.xlane.xlu0 %588
  %v590 = vsel %vm47, %v580, 0.0
  %591 = vadd.xlane.f32.xlu0 %v590
  %v592 = vpop.xlane.xlu0 %591
  %v593 = vsel %vm47, %v581, 0.0
  %594 = vadd.xlane.f32.xlu0 %v593
  %v595 = vpop.xlane.xlu0 %594
  %v596 = vsel %vm47, %v582, 0.0
  %597 = vadd.xlane.f32.xlu0 %v596
  %v598 = vpop.xlane.xlu0 %597
  %v599 = vsel %vm47, %v583, 0.0
  %600 = vadd.xlane.f32.xlu0 %v599
  %v601 = vpop.xlane.xlu0 %600
  %v602 = vsel %vm47, %v584, 0.0
  %603 = vadd.xlane.f32.xlu0 %v602
  %v604 = vpop.xlane.xlu0 %603
  %v605 = vsel %vm47, %v585, 0.0
  %606 = vadd.xlane.f32.xlu0 %v605
  %v607 = vpop.xlane.xlu0 %606
  %v608 = vsel %vm47, %v586, 0.0
  %609 = vadd.xlane.f32.xlu0 %v608
  %v610 = vpop.xlane.xlu0 %609
  %v619 = vlaneseq
  %v620 = vand.u32 %v619, 127
  %v621 = vlaneseq
  %v622 = vshrl.u32 %v621, 7
  %v623 = vsub.s32 %v620, %v622
  %v624 = vrot.slane %v467, %v623
  %v625 = vlaneseq
  %v626 = vshrl.u32 %v625, 7
  %v627 = vsub.s32 %v620, %v626
  %v628 = vrot.slane %v470, %v627
  %v629 = vlaneseq
  %v630 = vshrl.u32 %v629, 7
  %v631 = vsub.s32 %v620, %v630
  %v632 = vrot.slane %v473, %v631
  %v633 = vlaneseq
  %v634 = vshrl.u32 %v633, 7
  %v635 = vsub.s32 %v620, %v634
  %v636 = vrot.slane %v476, %v635
  %v637 = vlaneseq
  %v638 = vshrl.u32 %v637, 7
  %v639 = vsub.s32 %v620, %v638
  %v640 = vrot.slane %v479, %v639
  %v641 = vlaneseq
  %v642 = vshrl.u32 %v641, 7
  %v643 = vsub.s32 %v620, %v642
  %v644 = vrot.slane %v482, %v643
  %v645 = vlaneseq
  %v646 = vshrl.u32 %v645, 7
  %v647 = vsub.s32 %v620, %v646
  %v648 = vrot.slane %v485, %v647
  %v649 = vlaneseq
  %v650 = vshrl.u32 %v649, 7
  %v651 = vsub.s32 %v620, %v650
  %v652 = vrot.slane %v488, %v651
  %vm653 = vcmask 1041409
  %v654 = vsel %vm653, %v628, %v624
  %vm655 = vcmask 1042434
  %v656 = vsel %vm655, %v632, %v654
  %vm657 = vcmask 1043459
  %v658 = vsel %vm657, %v636, %v656
  %vm659 = vcmask 1044484
  %v660 = vsel %vm659, %v640, %v658
  %vm661 = vcmask 1045509
  %v662 = vsel %vm661, %v644, %v660
  %vm663 = vcmask 1046534
  %v664 = vsel %vm663, %v648, %v662
  %vm665 = vcmask 1047559
  %v666 = vsel %vm665, %v652, %v664
  %v668 = vmul.f32 %v456, %v666
  %v669 = vmax.f32 %v668, 1e-16
  %v670 = vrsqrt.pop %v669
  %v672 = vlaneseq
  %v673 = vshrl.u32 %v672, 7
  %v674 = vsub.s32 0, %v673
  %v675 = vrot.slane %v670, %v674
  %677 = vbcast.lane.b32.xlu0 %v675, 256
  %v678 = vpop.permute.xlu0 %677
  %v679 = vlaneseq
  %v680 = vshrl.u32 %v679, 7
  %v681 = vsub.s32 1, %v680
  %v682 = vrot.slane %v670, %v681
  %684 = vbcast.lane.b32.xlu0 %v682, 256
  %v685 = vpop.permute.xlu0 %684
  %v686 = vlaneseq
  %v687 = vshrl.u32 %v686, 7
  %v688 = vsub.s32 2, %v687
  %v689 = vrot.slane %v670, %v688
  %691 = vbcast.lane.b32.xlu0 %v689, 256
  %v692 = vpop.permute.xlu0 %691
  %v693 = vlaneseq
  %v694 = vshrl.u32 %v693, 7
  %v695 = vsub.s32 3, %v694
  %v696 = vrot.slane %v670, %v695
  %698 = vbcast.lane.b32.xlu0 %v696, 256
  %v699 = vpop.permute.xlu0 %698
  %v700 = vlaneseq
  %v701 = vshrl.u32 %v700, 7
  %v702 = vsub.s32 4, %v701
  %v703 = vrot.slane %v670, %v702
  %705 = vbcast.lane.b32.xlu0 %v703, 256
  %v706 = vpop.permute.xlu0 %705
  %v707 = vlaneseq
  %v708 = vshrl.u32 %v707, 7
  %v709 = vsub.s32 5, %v708
  %v710 = vrot.slane %v670, %v709
  %712 = vbcast.lane.b32.xlu0 %v710, 256
  %v713 = vpop.permute.xlu0 %712
  %v714 = vlaneseq
  %v715 = vshrl.u32 %v714, 7
  %v716 = vsub.s32 6, %v715
  %v717 = vrot.slane %v670, %v716
  %719 = vbcast.lane.b32.xlu0 %v717, 256
  %v720 = vpop.permute.xlu0 %719
  %v721 = vlaneseq
  %v722 = vshrl.u32 %v721, 7
  %v723 = vsub.s32 7, %v722
  %v724 = vrot.slane %v670, %v723
  %726 = vbcast.lane.b32.xlu0 %v724, 256
  %v727 = vpop.permute.xlu0 %726
  %v736 = vmul.f32 %v589, %v678
  %v737 = vmul.f32 %v592, %v685
  %v738 = vmul.f32 %v595, %v692
  %v739 = vmul.f32 %v598, %v699
  %v740 = vmul.f32 %v601, %v706
  %v741 = vmul.f32 %v604, %v713
  %v742 = vmul.f32 %v607, %v720
  %v743 = vmul.f32 %v610, %v727
  %v744 = vld [vmem:[%s3] sm:$0xff]
  %v746 = vlaneseq
  %v747 = vshrl.u32 %v746, 7
  %v748 = vsub.s32 0, %v747
  %v749 = vrot.slane %v744, %v748
  %751 = vbcast.lane.b32.xlu0 %v749, 256
  %v752 = vpop.permute.xlu0 %751
  %v753 = vlaneseq
  %v754 = vshrl.u32 %v753, 7
  %v755 = vsub.s32 1, %v754
  %v756 = vrot.slane %v744, %v755
  %758 = vbcast.lane.b32.xlu0 %v756, 256
  %v759 = vpop.permute.xlu0 %758
  %v760 = vlaneseq
  %v761 = vshrl.u32 %v760, 7
  %v762 = vsub.s32 2, %v761
  %v763 = vrot.slane %v744, %v762
  %765 = vbcast.lane.b32.xlu0 %v763, 256
  %v766 = vpop.permute.xlu0 %765
  %v767 = vlaneseq
  %v768 = vshrl.u32 %v767, 7
  %v769 = vsub.s32 3, %v768
  %v770 = vrot.slane %v744, %v769
  %772 = vbcast.lane.b32.xlu0 %v770, 256
  %v773 = vpop.permute.xlu0 %772
  %v774 = vlaneseq
  %v775 = vshrl.u32 %v774, 7
  %v776 = vsub.s32 4, %v775
  %v777 = vrot.slane %v744, %v776
  %779 = vbcast.lane.b32.xlu0 %v777, 256
  %v780 = vpop.permute.xlu0 %779
  %v781 = vlaneseq
  %v782 = vshrl.u32 %v781, 7
  %v783 = vsub.s32 5, %v782
  %v784 = vrot.slane %v744, %v783
  %786 = vbcast.lane.b32.xlu0 %v784, 256
  %v787 = vpop.permute.xlu0 %786
  %v788 = vlaneseq
  %v789 = vshrl.u32 %v788, 7
  %v790 = vsub.s32 6, %v789
  %v791 = vrot.slane %v744, %v790
  %793 = vbcast.lane.b32.xlu0 %v791, 256
  %v794 = vpop.permute.xlu0 %793
  %v795 = vlaneseq
  %v796 = vshrl.u32 %v795, 7
  %v797 = vsub.s32 7, %v796
  %v798 = vrot.slane %v744, %v797
  %800 = vbcast.lane.b32.xlu0 %v798, 256
  %v801 = vpop.permute.xlu0 %800
  %v810 = vmul.f32 %v736, %v752
  %v811 = vmul.f32 %v737, %v759
  %v812 = vmul.f32 %v738, %v766
  %v813 = vmul.f32 %v739, %v773
  %v814 = vmul.f32 %v740, %v780
  %v815 = vmul.f32 %v741, %v787
  %v816 = vmul.f32 %v742, %v794
  %v817 = vmul.f32 %v743, %v801
  %826 = vset.pattern.permute.xlu0 0
  %827 = vperm.xlu0 %826, %v810
  %v828 = vpop.permute.xlu0 %827
  %829 = vset.pattern.permute.xlu0 0
  %830 = vperm.xlu0 %829, %v811
  %v831 = vpop.permute.xlu0 %830
  %832 = vset.pattern.permute.xlu0 0
  %833 = vperm.xlu0 %832, %v812
  %v834 = vpop.permute.xlu0 %833
  %835 = vset.pattern.permute.xlu0 0
  %836 = vperm.xlu0 %835, %v813
  %v837 = vpop.permute.xlu0 %836
  %838 = vset.pattern.permute.xlu0 0
  %839 = vperm.xlu0 %838, %v814
  %v840 = vpop.permute.xlu0 %839
  %841 = vset.pattern.permute.xlu0 0
  %842 = vperm.xlu0 %841, %v815
  %v843 = vpop.permute.xlu0 %842
  %844 = vset.pattern.permute.xlu0 0
  %845 = vperm.xlu0 %844, %v816
  %v846 = vpop.permute.xlu0 %845
  %847 = vset.pattern.permute.xlu0 0
  %848 = vperm.xlu0 %847, %v817
  %v849 = vpop.permute.xlu0 %848
  %v850 = vlaneseq
  %v851 = vshrl.u32 %v850, 7
  %v852 = vsub.s32 %v620, %v851
  %v853 = vrot.slane %v828, %v852
  %v854 = vlaneseq
  %v855 = vshrl.u32 %v854, 7
  %v856 = vsub.s32 %v620, %v855
  %v857 = vrot.slane %v831, %v856
  %v858 = vlaneseq
  %v859 = vshrl.u32 %v858, 7
  %v860 = vsub.s32 %v620, %v859
  %v861 = vrot.slane %v834, %v860
  %v862 = vlaneseq
  %v863 = vshrl.u32 %v862, 7
  %v864 = vsub.s32 %v620, %v863
  %v865 = vrot.slane %v837, %v864
  %v866 = vlaneseq
  %v867 = vshrl.u32 %v866, 7
  %v868 = vsub.s32 %v620, %v867
  %v869 = vrot.slane %v840, %v868
  %v870 = vlaneseq
  %v871 = vshrl.u32 %v870, 7
  %v872 = vsub.s32 %v620, %v871
  %v873 = vrot.slane %v843, %v872
  %v874 = vlaneseq
  %v875 = vshrl.u32 %v874, 7
  %v876 = vsub.s32 %v620, %v875
  %v877 = vrot.slane %v846, %v876
  %v878 = vlaneseq
  %v879 = vshrl.u32 %v878, 7
  %v880 = vsub.s32 %v620, %v879
  %v881 = vrot.slane %v849, %v880
  %v882 = vsel %vm653, %v857, %v853
  %v883 = vsel %vm655, %v861, %v882
  %v884 = vsel %vm657, %v865, %v883
  %v885 = vsel %vm659, %v869, %v884
  %v886 = vsel %vm661, %v873, %v885
  %v887 = vsel %vm663, %v877, %v886
  %v888 = vsel %vm665, %v881, %v887
  %vm890 = vcmask 64512
  %v891 = vsel %vm890, %v888, -inf
  %892 = vmax.xlane.f32.xlu0 %v891
  %v893 = vpop.xlane.xlu0 %892
  %v895 = vlaneseq
  %v896 = vshrl.u32 %v895, 7
  %v897 = vsub.s32 0, %v896
  %v898 = vrot.slane %v893, %v897
  %v899 = vlaneseq
  %v900 = vshrl.u32 %v899, 7
  %v901 = vsub.s32 1, %v900
  %v902 = vrot.slane %v893, %v901
  %v903 = vlaneseq
  %v904 = vshrl.u32 %v903, 7
  %v905 = vsub.s32 2, %v904
  %v906 = vrot.slane %v893, %v905
  %v907 = vlaneseq
  %v908 = vshrl.u32 %v907, 7
  %v909 = vsub.s32 3, %v908
  %v910 = vrot.slane %v893, %v909
  %v911 = vlaneseq
  %v912 = vshrl.u32 %v911, 7
  %v913 = vsub.s32 4, %v912
  %v914 = vrot.slane %v893, %v913
  %v915 = vlaneseq
  %v916 = vshrl.u32 %v915, 7
  %v917 = vsub.s32 5, %v916
  %v918 = vrot.slane %v893, %v917
  %v919 = vlaneseq
  %v920 = vshrl.u32 %v919, 7
  %v921 = vsub.s32 6, %v920
  %v922 = vrot.slane %v893, %v921
  %v923 = vlaneseq
  %v924 = vshrl.u32 %v923, 7
  %v925 = vsub.s32 7, %v924
  %v926 = vrot.slane %v893, %v925
  %v935 = vsub.f32 %v810, %v898
  %v936 = vsub.f32 %v811, %v902
  %v937 = vsub.f32 %v812, %v906
  %v938 = vsub.f32 %v813, %v910
  %v939 = vsub.f32 %v814, %v914
  %v940 = vsub.f32 %v815, %v918
  %v941 = vsub.f32 %v816, %v922
  %v942 = vsub.f32 %v817, %v926
  %v943 = vmul.f32 %v935, 1.442695
  %v944 = vpow.pop %v943
  %v945 = vmul.f32 %v936, 1.442695
  %v946 = vpow.pop %v945
  %v947 = vmul.f32 %v937, 1.442695
  %v948 = vpow.pop %v947
  %v949 = vmul.f32 %v938, 1.442695
  %v950 = vpow.pop %v949
  %v951 = vmul.f32 %v939, 1.442695
  %v952 = vpow.pop %v951
  %v953 = vmul.f32 %v940, 1.442695
  %v954 = vpow.pop %v953
  %v955 = vmul.f32 %v941, 1.442695
  %v956 = vpow.pop %v955
  %v957 = vmul.f32 %v942, 1.442695
  %v958 = vpow.pop %v957
  %967 = vset.pattern.permute.xlu0 0
  %968 = vperm.xlu0 %967, %v944
  %v969 = vpop.permute.xlu0 %968
  %970 = vset.pattern.permute.xlu0 0
  %971 = vperm.xlu0 %970, %v946
  %v972 = vpop.permute.xlu0 %971
  %973 = vset.pattern.permute.xlu0 0
  %974 = vperm.xlu0 %973, %v948
  %v975 = vpop.permute.xlu0 %974
  %976 = vset.pattern.permute.xlu0 0
  %977 = vperm.xlu0 %976, %v950
  %v978 = vpop.permute.xlu0 %977
  %979 = vset.pattern.permute.xlu0 0
  %980 = vperm.xlu0 %979, %v952
  %v981 = vpop.permute.xlu0 %980
  %982 = vset.pattern.permute.xlu0 0
  %983 = vperm.xlu0 %982, %v954
  %v984 = vpop.permute.xlu0 %983
  %985 = vset.pattern.permute.xlu0 0
  %986 = vperm.xlu0 %985, %v956
  %v987 = vpop.permute.xlu0 %986
  %988 = vset.pattern.permute.xlu0 0
  %989 = vperm.xlu0 %988, %v958
  %v990 = vpop.permute.xlu0 %989
  %v991 = vlaneseq
  %v992 = vshrl.u32 %v991, 7
  %v993 = vsub.s32 %v620, %v992
  %v994 = vrot.slane %v969, %v993
  %v995 = vlaneseq
  %v996 = vshrl.u32 %v995, 7
  %v997 = vsub.s32 %v620, %v996
  %v998 = vrot.slane %v972, %v997
  %v999 = vlaneseq
  %v1000 = vshrl.u32 %v999, 7
  %v1001 = vsub.s32 %v620, %v1000
  %v1002 = vrot.slane %v975, %v1001
  %v1003 = vlaneseq
  %v1004 = vshrl.u32 %v1003, 7
  %v1005 = vsub.s32 %v620, %v1004
  %v1006 = vrot.slane %v978, %v1005
  %v1007 = vlaneseq
  %v1008 = vshrl.u32 %v1007, 7
  %v1009 = vsub.s32 %v620, %v1008
  %v1010 = vrot.slane %v981, %v1009
  %v1011 = vlaneseq
  %v1012 = vshrl.u32 %v1011, 7
  %v1013 = vsub.s32 %v620, %v1012
  %v1014 = vrot.slane %v984, %v1013
  %v1015 = vlaneseq
  %v1016 = vshrl.u32 %v1015, 7
  %v1017 = vsub.s32 %v620, %v1016
  %v1018 = vrot.slane %v987, %v1017
  %v1019 = vlaneseq
  %v1020 = vshrl.u32 %v1019, 7
  %v1021 = vsub.s32 %v620, %v1020
  %v1022 = vrot.slane %v990, %v1021
  %v1023 = vsel %vm653, %v998, %v994
  %v1024 = vsel %vm655, %v1002, %v1023
  %v1025 = vsel %vm657, %v1006, %v1024
  %v1026 = vsel %vm659, %v1010, %v1025
  %v1027 = vsel %vm661, %v1014, %v1026
  %v1028 = vsel %vm663, %v1018, %v1027
  %v1029 = vsel %vm665, %v1022, %v1028
  %v1031 = vsel %vm890, %v1029, 0.0
  %1032 = vadd.xlane.f32.xlu0 %v1031
  %v1033 = vpop.xlane.xlu0 %1032
  %v1034 = vrcp.pop %v1033
  %v1035 = vmul.f32 %v1033, %v1034
  %v1036 = vsub.f32 2.0, %v1035
  %v1037 = vmul.f32 %v1034, %v1036
  %v1039 = vlaneseq
  %v1040 = vshrl.u32 %v1039, 7
  %v1041 = vsub.s32 0, %v1040
  %v1042 = vrot.slane %v1037, %v1041
  %v1043 = vlaneseq
  %v1044 = vshrl.u32 %v1043, 7
  %v1045 = vsub.s32 1, %v1044
  %v1046 = vrot.slane %v1037, %v1045
  %v1047 = vlaneseq
  %v1048 = vshrl.u32 %v1047, 7
  %v1049 = vsub.s32 2, %v1048
  %v1050 = vrot.slane %v1037, %v1049
  %v1051 = vlaneseq
  %v1052 = vshrl.u32 %v1051, 7
  %v1053 = vsub.s32 3, %v1052
  %v1054 = vrot.slane %v1037, %v1053
  %v1055 = vlaneseq
  %v1056 = vshrl.u32 %v1055, 7
  %v1057 = vsub.s32 4, %v1056
  %v1058 = vrot.slane %v1037, %v1057
  %v1059 = vlaneseq
  %v1060 = vshrl.u32 %v1059, 7
  %v1061 = vsub.s32 5, %v1060
  %v1062 = vrot.slane %v1037, %v1061
  %v1063 = vlaneseq
  %v1064 = vshrl.u32 %v1063, 7
  %v1065 = vsub.s32 6, %v1064
  %v1066 = vrot.slane %v1037, %v1065
  %v1067 = vlaneseq
  %v1068 = vshrl.u32 %v1067, 7
  %v1069 = vsub.s32 7, %v1068
  %v1070 = vrot.slane %v1037, %v1069
  %v1079 = vmul.f32 %v944, %v1042
  %v1080 = vmul.f32 %v946, %v1046
  %v1081 = vmul.f32 %v948, %v1050
  %v1082 = vmul.f32 %v950, %v1054
  %v1083 = vmul.f32 %v952, %v1058
  %v1084 = vmul.f32 %v954, %v1062
  %v1085 = vmul.f32 %v956, %v1066
  %v1086 = vmul.f32 %v958, %v1070
  %1088 = vset.pattern.permute.xlu0 0
  %1089 = vperm.xlu0 %1088, %v1079
  %v1090 = vpop.permute.xlu0 %1089
  %1093 = vset.pattern.permute.xlu0 0
  %1094 = vperm.xlu0 %1093, %v1080
  %v1095 = vpop.permute.xlu0 %1094
  %1098 = vset.pattern.permute.xlu0 0
  %1099 = vperm.xlu0 %1098, %v1081
  %v1100 = vpop.permute.xlu0 %1099
  %1103 = vset.pattern.permute.xlu0 0
  %1104 = vperm.xlu0 %1103, %v1082
  %v1105 = vpop.permute.xlu0 %1104
  %1108 = vset.pattern.permute.xlu0 0
  %1109 = vperm.xlu0 %1108, %v1083
  %v1110 = vpop.permute.xlu0 %1109
  %1113 = vset.pattern.permute.xlu0 0
  %1114 = vperm.xlu0 %1113, %v1084
  %v1115 = vpop.permute.xlu0 %1114
  %1118 = vset.pattern.permute.xlu0 0
  %1119 = vperm.xlu0 %1118, %v1085
  %v1120 = vpop.permute.xlu0 %1119
  %1123 = vset.pattern.permute.xlu0 0
  %1124 = vperm.xlu0 %1123, %v1086
  %v1125 = vpop.permute.xlu0 %1124
  %v1127 = vmul.f32 %v1090, %v415
  %v1128 = vmul.f32 %v1095, %v420
  %v1129 = vmul.f32 %v1100, %v425
  %v1130 = vmul.f32 %v1105, %v430
  %v1131 = vmul.f32 %v1110, %v435
  %v1132 = vmul.f32 %v1115, %v440
  %v1133 = vmul.f32 %v1120, %v445
  %v1134 = vmul.f32 %v1125, %v450
  %v1135 = vsel %vm47, %v1127, 0.0
  %v1136 = vrot.slane %v1135, 4
  %v1137 = vadd.f32 %v1135, %v1136
  %v1138 = vrot.slane %v1137, 2
  %v1139 = vadd.f32 %v1137, %v1138
  %v1140 = vrot.slane %v1139, 1
  %v1141 = vadd.f32 %v1139, %v1140
  %v1142 = vsel %vm47, %v1128, 0.0
  %v1143 = vrot.slane %v1142, 4
  %v1144 = vadd.f32 %v1142, %v1143
  %v1145 = vrot.slane %v1144, 2
  %v1146 = vadd.f32 %v1144, %v1145
  %v1147 = vrot.slane %v1146, 1
  %v1148 = vadd.f32 %v1146, %v1147
  %v1149 = vsel %vm47, %v1129, 0.0
  %v1150 = vrot.slane %v1149, 4
  %v1151 = vadd.f32 %v1149, %v1150
  %v1152 = vrot.slane %v1151, 2
  %v1153 = vadd.f32 %v1151, %v1152
  %v1154 = vrot.slane %v1153, 1
  %v1155 = vadd.f32 %v1153, %v1154
  %v1156 = vsel %vm47, %v1130, 0.0
  %v1157 = vrot.slane %v1156, 4
  %v1158 = vadd.f32 %v1156, %v1157
  %v1159 = vrot.slane %v1158, 2
  %v1160 = vadd.f32 %v1158, %v1159
  %v1161 = vrot.slane %v1160, 1
  %v1162 = vadd.f32 %v1160, %v1161
  %v1163 = vsel %vm47, %v1131, 0.0
  %v1164 = vrot.slane %v1163, 4
  %v1165 = vadd.f32 %v1163, %v1164
  %v1166 = vrot.slane %v1165, 2
  %v1167 = vadd.f32 %v1165, %v1166
  %v1168 = vrot.slane %v1167, 1
  %v1169 = vadd.f32 %v1167, %v1168
  %v1170 = vsel %vm47, %v1132, 0.0
  %v1171 = vrot.slane %v1170, 4
  %v1172 = vadd.f32 %v1170, %v1171
  %v1173 = vrot.slane %v1172, 2
  %v1174 = vadd.f32 %v1172, %v1173
  %v1175 = vrot.slane %v1174, 1
  %v1176 = vadd.f32 %v1174, %v1175
  %v1177 = vsel %vm47, %v1133, 0.0
  %v1178 = vrot.slane %v1177, 4
  %v1179 = vadd.f32 %v1177, %v1178
  %v1180 = vrot.slane %v1179, 2
  %v1181 = vadd.f32 %v1179, %v1180
  %v1182 = vrot.slane %v1181, 1
  %v1183 = vadd.f32 %v1181, %v1182
  %v1184 = vsel %vm47, %v1134, 0.0
  %v1185 = vrot.slane %v1184, 4
  %v1186 = vadd.f32 %v1184, %v1185
  %v1187 = vrot.slane %v1186, 2
  %v1188 = vadd.f32 %v1186, %v1187
  %v1189 = vrot.slane %v1188, 1
  %v1190 = vadd.f32 %v1188, %v1189
  %v1199 = vsel %vm653, %v1148, %v1141
  %v1200 = vsel %vm655, %v1155, %v1199
  %v1201 = vsel %vm657, %v1162, %v1200
  %v1202 = vsel %vm659, %v1169, %v1201
  %v1203 = vsel %vm661, %v1176, %v1202
  %v1204 = vsel %vm663, %v1183, %v1203
  %v1205 = vsel %vm665, %v1190, %v1204
  %1207 = vst.msk [vmem:[%s10] sm:$0xff] %vm47, %v1205
  // Predicated region
  $region42: #{concept_similarity_memory_attention.1} parent=0 // pred_check
    _
  $region43: #{concept_similarity_memory_attention.1} parent=0 // pred_check_branch
    %1209 = sbr.rel (0) target = $region45
  $region44: #{concept_similarity_memory_attention.1} parent=0 // pred_region
    _
  $region45: #{concept_similarity_memory_attention.1} parent=0 // pred_fallthru
    _
  // Predicated region
  $region46: #{concept_similarity_memory_attention.1} parent=0 // pred_check
    _
  $region47: #{concept_similarity_memory_attention.1} parent=0 // pred_check_branch
    %1211 = sbr.rel (0) target = $region49
  $region48: #{concept_similarity_memory_attention.1} parent=0 // pred_region
    _
  $region49: #{concept_similarity_memory_attention.1} parent=0 // pred_fallthru
    _

</llo_original>
